<compile_context>
chip_gen: v6e
topology: v6e:2x2x1
jax: 0.10.0
libtpu: 0.0.40
codegen_flags: <defaults>
</compile_context>

<pallas_src>
import math

import jax
import jax.numpy as jnp
from jax.experimental import pallas as pl
from jax.experimental.pallas import tpu as pltpu


# ----------------------------------------------------------------------------
# Kernels
# ----------------------------------------------------------------------------
def _dyt_affine_kernel(alpha_ref, w_ref, b_ref, x_ref, o_ref):
    # alpha_ref: (1, 1) f32 in SMEM
    # w_ref, b_ref: (1, W) f32 in VMEM (broadcast over rows)
    # x_ref, o_ref: (TR, W) tile in VMEM
    alpha = alpha_ref[0, 0]
    t = jnp.tanh(alpha * x_ref[...].astype(jnp.float32))
    o_ref[...] = (w_ref[...] * t + b_ref[...]).astype(o_ref.dtype)


def _dyt_noaffine_kernel(alpha_ref, x_ref, o_ref):
    alpha = alpha_ref[0, 0]
    o_ref[...] = jnp.tanh(alpha * x_ref[...].astype(jnp.float32)).astype(o_ref.dtype)


# ----------------------------------------------------------------------------
# Layout helpers
# ----------------------------------------------------------------------------
def _round_up(a, b):
    return ((a + b - 1) // b) * b


def _tpu_tuning():
    """(generation, target x-block bytes, vmem_limit_bytes or None)."""
    kind = ""
    try:
        kind = jax.devices()[0].device_kind.lower()
    except Exception:  # pragma: no cover - defensive; fall back to safe tiles
        pass
    if "v7" in kind:
        # 3.2 TB/s HBM: 2 MiB steps would spend 20-30% in per-step overhead.
        return 7, 8 * 1024 * 1024, 48 * 1024 * 1024
    if "v6" in kind:
        return 6, 4 * 1024 * 1024, 48 * 1024 * 1024
    # v5e / unknown: default scoped VMEM is only 16 MiB; 2 MiB blocks
    # (x4 for double-buffered in+out) already sit on the roofline plateau.
    return 5, 2 * 1024 * 1024, None


def _choose_fold(rows_h, H):
    """Pick k (a divisor of rows_h) so W = k*H is lane-dense.

    Preference: W a multiple of 128 (unmasked vld/vst), then wider up to
    ~2048 lanes.  Only divisors of rows_h are considered so the fold is a
    pure reshape (no pad copy is ever reintroduced).
    """
    max_k = max(1, 4096 // max(H, 1))
    best_k = 1
    best_score = (1 if (H % 128 == 0) else 0, min(H, 2048))
    for k in range(2, max_k + 1):
        if rows_h % k:
            continue
        W = k * H
        score = (1 if (W % 128 == 0) else 0, min(W, 2048))
        if score > best_score:
            best_k, best_score = k, score
    return best_k


def _choose_row_tile(rows, W, dtype, target_bytes, gen):
    """Row tile: multiple of the sublane packing, ~target_bytes per x block."""
    itemsize = jnp.dtype(dtype).itemsize
    sub = max(8, 32 // itemsize)  # 8 f32, 16 bf16/f16
    tr = max(sub, (target_bytes // (W * itemsize)) // sub * sub)
    if tr >= rows:
        tr = rows  # single full block (block dim == full array dim is legal)
    # v7x has 2 TensorCores; "parallel" shards grid steps across them, so make
    # sure there are at least 2 steps when the tensor allows it.
    if gen >= 7 and pl.cdiv(rows, tr) < 2 and rows > sub:
        tr = max(sub, _round_up(pl.cdiv(rows, 2), sub))
        if tr >= rows:
            tr = rows
    return tr


# ----------------------------------------------------------------------------
# Wrapper
# ----------------------------------------------------------------------------
def dynamic_tanh(x, alpha, weight=None, bias=None, *, block_bytes=None):
    """Pallas DynamicTanh forward.

    x      : (..., H) float array
    alpha  : scalar parameter (shape (1,) like the PyTorch nn.Parameter)
    weight : (H,) or None
    bias   : (H,) or None
    block_bytes : optional override of the per-step x-block size (testing/tuning)
    """
    orig_shape = x.shape
    H = orig_shape[-1]
    N = x.size
    dtype = x.dtype
    assert jnp.issubdtype(dtype, jnp.floating), "DynamicTanh kernel is float-only"
    itemsize = jnp.dtype(dtype).itemsize

    gen, target_bytes, vmem_limit = _tpu_tuning()
    if block_bytes is not None:
        target_bytes = block_bytes

    rows_h = N // H                     # number of hidden-rows
    k = _choose_fold(rows_h, H)         # fold k hidden-rows per slab row
    W = k * H
    rows = rows_h // k
    tr = _choose_row_tile(rows, W, dtype, target_bytes, gen)

    # Pure reshape (no copy, no pad): element (r, c) of the slab has hidden
    # index c % H, so weight/bias broadcast as a single tiled (1, W) row.
    x2 = x.reshape(rows, W)
    alpha2 = jnp.asarray(alpha, dtype=jnp.float32).reshape(1, 1)

    grid = (pl.cdiv(rows, tr),)         # ragged: Pallas masks the partial block
    x_spec = pl.BlockSpec((tr, W), lambda i: (i, 0))
    out_spec = pl.BlockSpec((tr, W), lambda i: (i, 0))
    smem_spec = pl.BlockSpec(memory_space=pltpu.MemorySpace.SMEM)

    cp_kwargs = dict(dimension_semantics=("parallel",))
    if vmem_limit is not None:
        cp_kwargs["vmem_limit_bytes"] = vmem_limit
    cparams = pltpu.CompilerParams(**cp_kwargs)

    affine = (weight is not None) or (bias is not None)
    param_bytes = 2 * W * 4 if affine else 0
    cost = pl.CostEstimate(
        flops=(3 * N if affine else N),
        transcendentals=N,
        bytes_accessed=2 * N * itemsize + param_bytes + 4,
    )

    if affine:
        if weight is None:
            weight = jnp.ones((H,), dtype=jnp.float32)
        if bias is None:
            bias = jnp.zeros((H,), dtype=jnp.float32)
        # Affine params stay f32 inside the kernel (PyTorch params are f32).
        w2 = jnp.tile(weight.astype(jnp.float32).reshape(-1), k).reshape(1, W)
        b2 = jnp.tile(bias.astype(jnp.float32).reshape(-1), k).reshape(1, W)
        out = pl.pallas_call(
            _dyt_affine_kernel,
            out_shape=jax.ShapeDtypeStruct((rows, W), dtype),
            grid_spec=pltpu.PrefetchScalarGridSpec(
                num_scalar_prefetch=0,
                grid=grid,
                in_specs=[
                    smem_spec,                                # alpha (1,1) SMEM
                    pl.BlockSpec((1, W), lambda i: (0, 0)),   # weight (f32)
                    pl.BlockSpec((1, W), lambda i: (0, 0)),   # bias   (f32)
                    x_spec,                                   # x tile
                ],
                out_specs=out_spec,
            ),
            compiler_params=cparams,
            cost_estimate=cost,
        )(alpha2, w2, b2, x2)
    else:
        out = pl.pallas_call(
            _dyt_noaffine_kernel,
            out_shape=jax.ShapeDtypeStruct((rows, W), dtype),
            grid_spec=pltpu.PrefetchScalarGridSpec(
                num_scalar_prefetch=0,
                grid=grid,
                in_specs=[smem_spec, x_spec],
                out_specs=out_spec,
            ),
            compiler_params=cparams,
            cost_estimate=cost,
        )(alpha2, x2)

    # TODO(synk): optional bf16 tanh on v6e/v7x (doubles EUP throughput) was
    # intentionally skipped to keep f32-accurate numerics.
    return out.reshape(orig_shape)


# ----------------------------------------------------------------------------
# Self-test
# ----------------------------------------------------------------------------
if __name__ == "__main__":
    key = jax.random.PRNGKey(0)
    k1, k2, k3 = jax.random.split(key, 3)

    # Small DiT-like shapes: batch=2, seq=8, hidden=32
    B, S, H = 2, 8, 32
    x = jax.random.normal(k1, (B, S, H), dtype=jnp.float32)

    # Deterministic parameter init (matches nn.Module __init__):
    alpha_init_value = 0.5
    alpha = jnp.ones((1,), dtype=jnp.float32) * alpha_init_value  # torch.ones(1)*0.5
    weight = jnp.ones((H,), dtype=jnp.float32)                    # torch.ones(normalized_shape)
    bias = jnp.zeros((H,), dtype=jnp.float32)                     # torch.zeros(normalized_shape)

    # elementwise_affine=True path
    y = jax.block_until_ready(dynamic_tanh(x, alpha, weight, bias))
    y_ref = weight * jnp.tanh(alpha[0] * x) + bias
    assert jnp.allclose(y, y_ref, atol=1e-6, rtol=1e-6), "mismatch (affine=True)"

    # elementwise_affine=False path (dedicated no-affine kernel)
    y2 = jax.block_until_ready(dynamic_tanh(x, alpha))
    y2_ref = jnp.tanh(alpha[0] * x)
    assert jnp.allclose(y2, y2_ref, atol=1e-6, rtol=1e-6), "mismatch (affine=False)"

    # Leading-dim count not a nice power of two: exercises the divisor-based
    # fold (no pad copy is ever created).
    x3 = jax.random.normal(k2, (3, 10, H), dtype=jnp.float32)
    y3 = jax.block_until_ready(dynamic_tanh(x3, alpha, weight, bias))
    y3_ref = weight * jnp.tanh(alpha[0] * x3) + bias
    assert jnp.allclose(y3, y3_ref, atol=1e-6, rtol=1e-6), "mismatch (fold)"

    # Ragged cdiv grid: force a tiny block so rows % tr != 0 and Pallas masks
    # the partial last block on store.
    H2 = 128
    x4 = jax.random.normal(k3, (9, 16, H2), dtype=jnp.float32)
    w4 = jnp.linspace(0.5, 1.5, H2, dtype=jnp.float32)
    b4 = jnp.linspace(-0.1, 0.1, H2, dtype=jnp.float32)
    y4 = jax.block_until_ready(
        dynamic_tanh(x4, alpha, w4, b4, block_bytes=64 * 1024))
    y4_ref = w4 * jnp.tanh(alpha[0] * x4) + b4
    assert jnp.allclose(y4, y4_ref, atol=1e-6, rtol=1e-6), "mismatch (ragged grid)"

    # bf16 input: f32 params + f32 compute, explicit narrow cast on the store.
    xb = x.astype(jnp.bfloat16)
    yb = jax.block_until_ready(dynamic_tanh(xb, alpha, weight, bias))
    yb_ref = (weight * jnp.tanh(alpha[0] * xb.astype(jnp.float32)) + bias)
    assert yb.dtype == jnp.bfloat16
    assert jnp.allclose(yb.astype(jnp.float32), yb_ref, atol=1e-2, rtol=1e-2), \
        "mismatch (bf16)"

    print("KERNEL_OK")
</pallas_src>

<mosaic_0001>
module attributes {stable_mosaic.version = 11 : i64} {
  func.func @_dyt_affine_kernel(%arg0: i32, %arg1: memref<1x1xf32, #tpu.memory_space<smem>>, %arg2: memref<1x512xf32, #tpu.memory_space<vmem>>, %arg3: memref<1x512xf32, #tpu.memory_space<vmem>>, %arg4: memref<1x512xf32, #tpu.memory_space<vmem>>, %arg5: memref<1x512xf32, #tpu.memory_space<vmem>>) attributes {dimension_semantics = [#tpu.dimension_semantics<parallel>], iteration_bounds = array<i64: 1>, scalar_prefetch = 0 : i64, scratch_operands = 0 : i64, tpu.core_type = #tpu.core_type<tc>, window_params = [{transform_indices = @transform_0, window_bounds = array<i64: 1, 1>}, {pipeline_mode = #tpu.pipeline_mode<synchronous>, transform_indices = @transform_1, window_bounds = array<i64: 1, 512>}, {pipeline_mode = #tpu.pipeline_mode<synchronous>, transform_indices = @transform_2, window_bounds = array<i64: 1, 512>}, {transform_indices = @transform_3, window_bounds = array<i64: 1, 512>}, {transform_indices = @transform_4, window_bounds = array<i64: 1, 512>}]} {
    %c0 = arith.constant 0 : index
    %c0_0 = arith.constant 0 : index
    %0 = memref.load %arg1[%c0, %c0_0] : memref<1x1xf32, #tpu.memory_space<smem>>
    %c0_1 = arith.constant 0 : index
    %c0_2 = arith.constant 0 : index
    %1 = vector.load %arg4[%c0_1, %c0_2] : memref<1x512xf32, #tpu.memory_space<vmem>>, vector<1x512xf32>
    %2 = vector.broadcast %0 : f32 to vector<1x512xf32>
    %3 = arith.mulf %2, %1 : vector<1x512xf32>
    %4 = math.tanh %3 : vector<1x512xf32>
    %c0_3 = arith.constant 0 : index
    %c0_4 = arith.constant 0 : index
    %5 = vector.load %arg2[%c0_3, %c0_4] : memref<1x512xf32, #tpu.memory_space<vmem>>, vector<1x512xf32>
    %6 = arith.mulf %5, %4 : vector<1x512xf32>
    %c0_5 = arith.constant 0 : index
    %c0_6 = arith.constant 0 : index
    %7 = vector.load %arg3[%c0_5, %c0_6] : memref<1x512xf32, #tpu.memory_space<vmem>>, vector<1x512xf32>
    %8 = arith.addf %6, %7 : vector<1x512xf32>
    %c0_7 = arith.constant 0 : index
    %c0_8 = arith.constant 0 : index
    %9 = vector.load %arg5[%c0_7, %c0_8] : memref<1x512xf32, #tpu.memory_space<vmem>>, vector<1x512xf32>
    tpu.vector_store %arg5[%c0_7, %c0_8], %8 {strides = array<i32>} : memref<1x512xf32, #tpu.memory_space<vmem>>, vector<1x512xf32>,
    return
  }
  func.func @transform_0(%arg0: i32) -> (i32, i32) {
    %c0_i32 = arith.constant 0 : i32
    %c0_i32_0 = arith.constant 0 : i32
    %c0_i32_1 = arith.constant 0 : i32
    return %c0_i32, %c0_i32_0 : i32, i32
  }
  func.func @transform_1(%arg0: i32) -> (i32, i32) {
    %c0_i32 = arith.constant 0 : i32
    %c0_i32_0 = arith.constant 0 : i32
    %c0_i32_1 = arith.constant 0 : i32
    return %c0_i32, %c0_i32_0 : i32, i32
  }
  func.func @transform_2(%arg0: i32) -> (i32, i32) {
    %c0_i32 = arith.constant 0 : i32
    %c0_i32_0 = arith.constant 0 : i32
    %c0_i32_1 = arith.constant 0 : i32
    return %c0_i32, %c0_i32_0 : i32, i32
  }
  func.func @transform_3(%arg0: i32) -> (i32, i32) {
    %c0_i32 = arith.constant 0 : i32
    %c0_i32_0 = arith.constant 0 : i32
    return %arg0, %c0_i32 : i32, i32
  }
  func.func @transform_4(%arg0: i32) -> (i32, i32) {
    %c0_i32 = arith.constant 0 : i32
    %c0_i32_0 = arith.constant 0 : i32
    return %arg0, %c0_i32 : i32, i32
  }
}

</mosaic_0001>

<llo_original>
// kernel: tpu_custom_call.1
$region0: #{tpu_custom_call.1}
  #allocation0 [shape = 'u32[]', space=smem, size = 0x4, offset = 0x4, fixed_abs, tag = 'smem constant byte address 0x4 - core index']
  #allocation1 [shape = 'u32[144,128]{1,0:T(1,128)}', space=vmem, size = 0x12000, scoped, tag = 'internal scratch']
  #allocation2 [shape = 'f32[1,1]{1,0:T(1,128)S(6)}', space=smem, size = 0x200, scoped, tag = 'scoped memory for tpu_custom_call.1']
  %s0 = inlined_call_operand.<no memory space> [shape: f32[1,1], index: 0, kind: input, shape index: {}]
  %s1 = inlined_call_operand.hbm [shape: f32[1,512], index: 1, kind: input, shape index: {}]
  %s2 = inlined_call_operand.hbm [shape: f32[1,512], index: 2, kind: input, shape index: {}]
  %s3 = inlined_call_operand.vmem [shape: f32[1,512], index: 3, kind: input, shape index: {}]
  %s4 = inlined_call_operand.hbm [shape: f32[1,512], index: 4, kind: output, shape index: {}]
  %s5 = sld [smem:[#allocation0]]
  $region34: #{tpu_custom_call.1} parent=0
    _
  %s7 = ssub.s32 1, %s5
  %s8 = scalar_select 0, %s7, %s5
  %9 = sst [smem:[#allocation2]] %s0
  $region1: #{tpu_custom_call.1} parent=0
    #allocation3 [shape = 'u8[2048]{0}', space=vmem, size = 0x800, scoped, tag = 'input window, operand 1, single buffered']
    #allocation4 [shape = 's32[1]{0}', space=sflag, size = 0x4, scoped, tag = 'scoped memory for tpu_custom_call.1']
    #allocation5 [shape = 's32[1]{0}', space=sflag, size = 0x4, scoped, tag = 'scoped memory for tpu_custom_call.1']
    #allocation6 [shape = 'u8[2048]{0}', space=vmem, size = 0x800, scoped, tag = 'input window, operand 2, single buffered']
    #allocation7 [shape = 's32[1]{0}', space=sflag, size = 0x4, scoped, tag = 'scoped memory for tpu_custom_call.1']
    #allocation8 [shape = 'u8[2048]{0}', space=vmem, size = 0x800, scoped, tag = 'output window, operand 0, single buffered']
    %10 = vsyncpa [#allocation4], 0
    %11 = vsyncpa [#allocation7], 0
    %12 = vsyncpa [#allocation5], 0
    // Predicated region
    $region2: #{tpu_custom_call.1} parent=1 // pred_check
      _
    $region3: #{tpu_custom_call.1} parent=1 // pred_check_branch
      %14 = sbr.rel (0) target = $region5
    $region4: #{tpu_custom_call.1} parent=1 // pred_region
      _
    $region5: #{tpu_custom_call.1} parent=1 // pred_fallthru
      _
    // Predicated region
    $region6: #{tpu_custom_call.1} parent=1 // pred_check
      _
    $region7: #{tpu_custom_call.1} parent=1 // pred_check_branch
      %16 = sbr.rel (0) target = $region9
    $region8: #{tpu_custom_call.1} parent=1 // pred_region
      %s18 = ssub.s32 64, 64
      %19 = vsyncadd [#allocation4], %s18
      %s21 = sshll.u32 [#allocation3], 4
      %s22 = int_to_ptr.vmem [resolvable:$true] %s21
      %24 = dma.hbm_to_vmem [thread:$0]  %s1, 64, %s22, [#allocation4]
    $region9: #{tpu_custom_call.1} parent=1 // pred_fallthru
      _
    // Predicated region
    $region10: #{tpu_custom_call.1} parent=1 // pred_check
      _
    $region11: #{tpu_custom_call.1} parent=1 // pred_check_branch
      %26 = sbr.rel (0) target = $region13
    $region12: #{tpu_custom_call.1} parent=1 // pred_region
      %s28 = ssub.s32 64, 64
      %29 = vsyncadd [#allocation7], %s28
      %s31 = sshll.u32 [#allocation6], 4
      %s32 = int_to_ptr.vmem [resolvable:$true] %s31
      %34 = dma.hbm_to_vmem [thread:$0]  %s2, 64, %s32, [#allocation7]
    $region13: #{tpu_custom_call.1} parent=1 // pred_fallthru
      _
    // Predicated region
    $region14: #{tpu_custom_call.1} parent=1 // pred_check
      _
    $region15: #{tpu_custom_call.1} parent=1 // pred_check_branch
      %36 = sbr.rel (0) target = $region17
    $region16: #{tpu_custom_call.1} parent=1 // pred_region
      _
    $region17: #{tpu_custom_call.1} parent=1 // pred_fallthru
      _
    // Predicated region
    $region18: #{tpu_custom_call.1} parent=1 // pred_check
      _
    $region19: #{tpu_custom_call.1} parent=1 // pred_check_branch
      %38 = sbr.rel (0) target = $region21
    $region20: #{tpu_custom_call.1} parent=1 // pred_region
      %39 = dma.done [#allocation4], 64
    $region21: #{tpu_custom_call.1} parent=1 // pred_fallthru
      _
    // Predicated region
    $region22: #{tpu_custom_call.1} parent=1 // pred_check
      _
    $region23: #{tpu_custom_call.1} parent=1 // pred_check_branch
      %41 = sbr.rel (0) target = $region25
    $region24: #{tpu_custom_call.1} parent=1 // pred_region
      %42 = dma.done [#allocation7], 64
    $region25: #{tpu_custom_call.1} parent=1 // pred_fallthru
      _
    %s43 = sld [smem:[#allocation2]]
    %v44 = vld [vmem:[%s3] sm:$0xf]
    %v45 = vstv %s43
    %v46 = vmul.f32 %v45, %v44
    %v47 = vtanh.pop %v46
    %v48 = vld [vmem:[#allocation3] sm:$0xf]
    %v49 = vmul.f32 %v48, %v47
    %v50 = vld [vmem:[#allocation6] sm:$0xf]
    %v51 = vadd.f32 %v49, %v50
    %v52 = vlaneseq
    %vm53 = vcmp.ge.s32.totalorder %v52, 0
    %vm54 = vcmp.lt.s32.totalorder %v52, 512
    %vm55 = vmand %vm53, %vm54
    %56 = vst.msk [vmem:[#allocation8] sm:$0xf] %vm55, %v51
    // Predicated region
    $region26: #{tpu_custom_call.1} parent=1 // pred_check
      _
    $region27: #{tpu_custom_call.1} parent=1 // pred_check_branch
      %58 = sbr.rel (0) target = $region29
    $region28: #{tpu_custom_call.1} parent=1 // pred_region
      %s60 = ssub.s32 64, 64
      %61 = vsyncadd [#allocation5], %s60
      %s63 = sshll.u32 [#allocation8], 4
      %s64 = int_to_ptr.vmem [resolvable:$true] %s63
      %66 = dma.vmem_to_hbm [thread:$0]  %s64, 64, %s4, [#allocation5]
    $region29: #{tpu_custom_call.1} parent=1 // pred_fallthru
      _
    // Predicated region
    $region30: #{tpu_custom_call.1} parent=1 // pred_check
      _
    $region31: #{tpu_custom_call.1} parent=1 // pred_check_branch
      %68 = sbr.rel (0) target = $region33
    $region32: #{tpu_custom_call.1} parent=1 // pred_region
      %69 = dma.done [#allocation5], 64
    $region33: #{tpu_custom_call.1} parent=1 // pred_fallthru
      _
    %70 = vsyncpa [#allocation4], 1
    %71 = vsyncpa [#allocation7], 1
    %72 = vsyncpa [#allocation5], 1

</llo_original>
